<compile_context>
chip_gen: v7x
topology: tpu7x:2x2x1
jax: 0.10.0
libtpu: 0.0.40
codegen_flags: <defaults>
</compile_context>

<pallas_src>
import functools
import math

import jax
import jax.numpy as jnp
from jax import lax
from jax.experimental import pallas as pl
from jax.experimental.pallas import tpu as pltpu


# Scoped-VMEM cap: above the default scoped limits, comfortably below v7x's
# 64 MiB physical VMEM per TensorCore.  For BERT-large f32 on v7x convert the
# weights to bf16 (prepare_decoder_params(dtype=jnp.bfloat16)).
_VMEM_LIMIT_BYTES = 40 * 1024 * 1024
_DEFAULT_ROW_TILE = 256          # MXU-friendly M tile (clamped to a divisor of N)
_LN_EPS = 1e-12
_SQRT2 = math.sqrt(2.0)
_MASK_PAD = -10000.0


# --------------------------------------------------------------------------- #
# small helpers
# --------------------------------------------------------------------------- #
def _round_up(n, m):
    return ((n + m - 1) // m) * m


def _pick_row_tile(n_rows, requested):
    """Largest multiple-of-8 divisor of n_rows that is <= requested (>= 8)."""
    assert n_rows % 8 == 0, "row count must be a multiple of 8"
    t = max(8, min(requested, n_rows))
    t -= t % 8
    t = max(t, 8)
    while n_rows % t:
        t -= 8
    return t


def _as3(a):
    """Activations: [N, C] -> [1, N, C] (shared across the branch axis)."""
    return a if a.ndim == 3 else a[None]


def _lead_fn(a, fixed=None):
    """Leading (branch) block-index selector for a [G-or-1, ...] array."""
    if fixed is not None:
        f = int(fixed)
        return lambda g: f
    if a.shape[0] == 1:
        return lambda g: 0
    return lambda g: g


def _erf_approx(x):
    """Abramowitz & Stegun 7.1.26 erf approximation (|abs err| <= 1.5e-7).

    Uses only exp / mul / add / select / one divide so it lowers cleanly in
    Mosaic while keeping the module's exact (erf-based) gelu semantics.
    """
    a1, a2, a3, a4, a5 = (0.254829592, -0.284496736, 1.421413741,
                          -1.453152027, 1.061405429)
    p = 0.3275911
    ax = jnp.abs(x)
    t = 1.0 / (1.0 + p * ax)     # kept exact to preserve the erf error budget
    poly = ((((a5 * t + a4) * t + a3) * t + a2) * t + a1) * t
    y = 1.0 - poly * jnp.exp(-ax * ax)
    return jnp.where(x < 0, -y, y)


def _gelu(x):
    # BERT gelu: x * 0.5 * (1 + erf(x / sqrt(2)))
    return x * 0.5 * (1.0 + _erf_approx(x * (1.0 / _SQRT2)))


def _fast_recip(x):
    """EUP approximate reciprocal + one Newton step (~f32 accuracy)."""
    r = pl.reciprocal(x, approx=True)
    return r * (2.0 - x * r)


# --------------------------------------------------------------------------- #
# kernel 1: branch-stacked fused linear (+ optional erf-gelu)
# --------------------------------------------------------------------------- #
def _linear_kernel(x_ref, w_ref, b_ref, o_ref, *, activation):
    # Operands feed the MXU in their native dtype; f32 accumulation comes from
    # preferred_element_type; only the epilogue runs in f32.
    h = jnp.dot(x_ref[...], w_ref[...], preferred_element_type=jnp.float32)
    h = h + b_ref[...].astype(jnp.float32)
    if activation == "gelu":
        h = _gelu(h)
    o_ref[...] = h.astype(o_ref.dtype)


def fused_linear(x, w, b, *, activation=None, row_tile=_DEFAULT_ROW_TILE):
    """out[g] = act(x[g|0] @ w[g|0] + b[g|0]).

    x: [N, K] (shared) or [G, N, K];  w: [Gw, K, M];  b: [Gb, 1, M]
    Arrays with a leading dim of 1 are shared across branches and their blocks
    keep a constant index_map (resident in VMEM, DMA'd once).
    """
    x3 = _as3(x)
    G = max(x3.shape[0], w.shape[0])
    _, N, K = x3.shape
    M = w.shape[-1]
    tile = _pick_row_tile(N, row_tile)
    lx, lw, lb = _lead_fn(x3), _lead_fn(w), _lead_fn(b)

    return pl.pallas_call(
        functools.partial(_linear_kernel, activation=activation),
        out_shape=jax.ShapeDtypeStruct((G, N, M), x3.dtype),
        grid_spec=pltpu.PrefetchScalarGridSpec(
            num_scalar_prefetch=0,
            grid=(G, N // tile),
            in_specs=[
                pl.BlockSpec((None, tile, K), lambda g, i: (lx(g), i, 0)),
                # Constant row index -> weight stays resident across the row sweep.
                pl.BlockSpec((None, K, M), lambda g, i: (lw(g), 0, 0)),
                pl.BlockSpec((None, 1, M), lambda g, i: (lb(g), 0, 0)),
            ],
            out_specs=pl.BlockSpec((None, tile, M), lambda g, i: (g, i, 0)),
        ),
        compiler_params=pltpu.CompilerParams(
            # Branch axis parallel (megacore split by branch -> disjoint resident
            # weights per TensorCore); row axis is a plain pipelined sweep.
            dimension_semantics=("parallel", "arbitrary"),
            vmem_limit_bytes=_VMEM_LIMIT_BYTES),
    )(x3, w, b)


# --------------------------------------------------------------------------- #
# kernel 2: branch-stacked fused dense + residual + LayerNorm
# --------------------------------------------------------------------------- #
def _dense_residual_ln_kernel(x_ref, w_ref, b_ref, res_ref, g_ref, beta_ref,
                              o_ref, *, eps):
    # h = x @ W + b + residual    (dropout = identity, eval mode)
    # TODO(synk): training-mode dropout (pltpu.prng_random_bits) not implemented.
    h = jnp.dot(x_ref[...], w_ref[...], preferred_element_type=jnp.float32)
    h = h + b_ref[...].astype(jnp.float32) + res_ref[...].astype(jnp.float32)
    # Centered (two-pass) LayerNorm statistics: safe against cancellation.
    mean = jnp.mean(h, axis=-1, keepdims=True)
    c = h - mean
    var = jnp.mean(c * c, axis=-1, keepdims=True)
    out = c * lax.rsqrt(var + eps)
    out = out * g_ref[...].astype(jnp.float32) + beta_ref[...].astype(jnp.float32)
    o_ref[...] = out.astype(o_ref.dtype)


def fused_dense_residual_layernorm(x, w, b, residual, gamma, beta, *,
                                   residual_branch=None, eps=_LN_EPS,
                                   row_tile=_DEFAULT_ROW_TILE):
    """out[g] = LayerNorm(x[g] @ w[g|0] + b[g|0] + residual) * gamma[g|0] + beta[g|0].

    x: [G, N, K] or [N, K];  w: [Gw, K, H];  b/gamma/beta: [Gb, 1, H];
    residual: [Gr, N, H] or [N, H].  residual_branch pins the residual to one
    branch (BertDeSelfOutput uses the *c* residual for both streams).
    """
    x3 = _as3(x)
    r3 = _as3(residual)
    G = max(x3.shape[0], w.shape[0])
    _, N, K = x3.shape
    H = w.shape[-1]
    tile = _pick_row_tile(N, row_tile)
    lx, lw, lb = _lead_fn(x3), _lead_fn(w), _lead_fn(b)
    lr = _lead_fn(r3, residual_branch)
    lg, lbe = _lead_fn(gamma), _lead_fn(beta)

    return pl.pallas_call(
        functools.partial(_dense_residual_ln_kernel, eps=eps),
        out_shape=jax.ShapeDtypeStruct((G, N, H), x3.dtype),
        grid_spec=pltpu.PrefetchScalarGridSpec(
            num_scalar_prefetch=0,
            grid=(G, N // tile),
            in_specs=[
                pl.BlockSpec((None, tile, K), lambda g, i: (lx(g), i, 0)),
                pl.BlockSpec((None, K, H), lambda g, i: (lw(g), 0, 0)),   # resident
                pl.BlockSpec((None, 1, H), lambda g, i: (lb(g), 0, 0)),
                pl.BlockSpec((None, tile, H), lambda g, i: (lr(g), i, 0)),
                pl.BlockSpec((None, 1, H), lambda g, i: (lg(g), 0, 0)),
                pl.BlockSpec((None, 1, H), lambda g, i: (lbe(g), 0, 0)),
            ],
            out_specs=pl.BlockSpec((None, tile, H), lambda g, i: (g, i, 0)),
        ),
        compiler_params=pltpu.CompilerParams(
            dimension_semantics=("parallel", "arbitrary"),
            vmem_limit_bytes=_VMEM_LIMIT_BYTES),
    )(x3, w, b, r3, gamma, beta)


# --------------------------------------------------------------------------- #
# kernel 3: softmax attention, both branches + all heads per grid step
# --------------------------------------------------------------------------- #
def _attention_kernel(q_ref, kv_ref, m_ref, o_ref, *, num_heads, head_dim,
                      scale, q_off, k_off, v_off):
    m = m_ref[...].astype(jnp.float32)                     # (1, S) additive mask
    outs = []
    for h in range(num_heads):                             # heads merged per step
        lo = h * head_dim
        qh = q_ref[:, q_off + lo: q_off + lo + head_dim]   # native dtype -> MXU
        kh = kv_ref[:, k_off + lo: k_off + lo + head_dim]
        vh = kv_ref[:, v_off + lo: v_off + lo + head_dim]
        s = lax.dot_general(qh, kh, (((1,), (1,)), ((), ())),
                            preferred_element_type=jnp.float32)      # (S, S)
        s = s * scale + m
        s = s - jnp.max(s, axis=-1, keepdims=True)         # stable softmax (f32)
        p = jnp.exp(s)
        denom = jnp.sum(p, axis=-1, keepdims=True)
        p = p * _fast_recip(denom)                          # EUP recip + Newton
        # TODO(synk): attention-probs dropout (training mode) not implemented.
        o = jnp.dot(p.astype(vh.dtype), vh, preferred_element_type=jnp.float32)
        outs.append(o)
    # One lane-dense (S, H) store (H = num_heads * head_dim).
    o_ref[...] = jnp.concatenate(outs, axis=-1).astype(o_ref.dtype)


def branch_attention(proj, masks, *, num_heads):
    """softmax(Q K^T * scale + mask) V for both attention branches.

    proj : [2, B, S, 3H] fused projection output,
           branch 0 (c stream): [ key   | value  | qquery ]
           branch 1 (q stream): [ qkey  | qvalue | query  ]
    masks: [2, B, 1, S] additive (branch 0 = cmask, branch 1 = qmask)
    Returns [2, B, S, H]: branch 0 = context_layer, branch 1 = q_layer.

    TODO(synk): holds a full SxS score tile per head; switch to flash-style KV
    tiling for long sequences.
    """
    _, B, S, threeH = proj.shape
    H = threeH // 3
    D = H // num_heads
    scale = 1.0 / math.sqrt(D)

    if H % 128 == 0:
        # Lane-aligned chunk selection directly in the BlockSpec: only the 3H
        # columns that are actually used are DMA'd, no transposes/concats.
        q_spec = pl.BlockSpec((None, None, S, H), lambda bi, b: (1 - bi, b, 0, 2))
        kv_spec = pl.BlockSpec((None, None, S, 2 * H), lambda bi, b: (bi, b, 0, 0))
        q_off, k_off, v_off = 0, 0, H
    else:
        # Fallback for H not a multiple of 128: move whole 3H-wide blocks and
        # slice the chunks in-kernel (extra DMA, still correct).
        q_spec = pl.BlockSpec((None, None, S, threeH), lambda bi, b: (1 - bi, b, 0, 0))
        kv_spec = pl.BlockSpec((None, None, S, threeH), lambda bi, b: (bi, b, 0, 0))
        q_off, k_off, v_off = 2 * H, 0, H

    return pl.pallas_call(
        functools.partial(_attention_kernel, num_heads=num_heads, head_dim=D,
                          scale=scale, q_off=q_off, k_off=k_off, v_off=v_off),
        out_shape=jax.ShapeDtypeStruct((2, B, S, H), proj.dtype),
        grid_spec=pltpu.PrefetchScalarGridSpec(
            num_scalar_prefetch=0,
            grid=(2, B),
            in_specs=[
                q_spec,                                   # Q of the *other* stream
                kv_spec,                                  # K,V of this stream
                pl.BlockSpec((None, None, 1, S), lambda bi, b: (bi, b, 0, 0)),
            ],
            out_specs=pl.BlockSpec((None, None, S, H), lambda bi, b: (bi, b, 0, 0)),
        ),
        compiler_params=pltpu.CompilerParams(
            dimension_semantics=("parallel", "arbitrary"),
            vmem_limit_bytes=_VMEM_LIMIT_BYTES),
    )(proj, proj, masks)


# --------------------------------------------------------------------------- #
# one-time parameter preprocessing (perf feedback: hoist all stacking/fusion)
# --------------------------------------------------------------------------- #
def prepare_layer_params(p, dtype=None):
    """Fuse/stack weights ONCE: two QKV-fused projection matrices, per-branch
    stacks for intermediate/output, shared attnout weights kept un-duplicated.
    Optionally cast to `dtype` (e.g. jnp.bfloat16 for v6e/v7x)."""
    c = (lambda a: a.astype(dtype)) if dtype is not None else (lambda a: a)
    # stream 0 (c): [ key | value | qquery ], stream 1 (q): [ qkey | qvalue | query ]
    c_proj_w = jnp.concatenate([p["attn_k_w"], p["attn_v_w"], p["attn_qq_w"]], axis=1)
    q_proj_w = jnp.concatenate([p["attn_qk_w"], p["attn_qv_w"], p["attn_q_w"]], axis=1)
    c_proj_b = jnp.concatenate([p["attn_k_b"], p["attn_v_b"], p["attn_qq_b"]])
    q_proj_b = jnp.concatenate([p["attn_qk_b"], p["attn_qv_b"], p["attn_q_b"]])
    return {
        "proj_w": c(jnp.stack([c_proj_w, q_proj_w])),                 # [2, H, 3H]
        "proj_b": c(jnp.stack([c_proj_b, q_proj_b])[:, None, :]),     # [2, 1, 3H]
        # BertDeSelfOutput: the module reuses dense/LayerNorm for both branches.
        "attnout_w": c(p["attnout_w"][None]),                         # [1, H, H]
        "attnout_b": c(p["attnout_b"][None, None, :]),                # [1, 1, H]
        "attnout_ln_g": c(p["attnout_ln_g"][None, None, :]),
        "attnout_ln_b": c(p["attnout_ln_b"][None, None, :]),
        "inter_w": c(jnp.stack([p["inter_w"], p["inter_qw"]])),       # [2, H, I]
        "inter_b": c(jnp.stack([p["inter_b"], p["inter_qb"]])[:, None, :]),
        "out_w": c(jnp.stack([p["out_w"], p["out_qw"]])),             # [2, I, H]
        "out_b": c(jnp.stack([p["out_b"], p["out_qb"]])[:, None, :]),
        "out_ln_g": c(jnp.stack([p["out_ln_g"], p["out_qln_g"]])[:, None, :]),
        "out_ln_b": c(jnp.stack([p["out_ln_b"], p["out_qln_b"]])[:, None, :]),
    }


def prepare_decoder_params(layer_params, dtype=None):
    return [prepare_layer_params(p, dtype) for p in layer_params]


# --------------------------------------------------------------------------- #
# BertDeLayer / BertDecoder forward (eval mode)
# --------------------------------------------------------------------------- #
def bert_de_layer_forward(x, masks, p, *, B, Spad, num_heads,
                          row_tile=_DEFAULT_ROW_TILE, eps=_LN_EPS):
    """x: [2, N, H] (branch 0 = c stream, branch 1 = q stream) or [N, H] for
    the first layer (c == q).  Returns [2, N, H]."""
    H = p["proj_w"].shape[1]

    # ---- BertMultiAttention: one QKV-fused GEMM per stream ------------------
    proj = fused_linear(x, p["proj_w"], p["proj_b"], row_tile=row_tile)  # [2,N,3H]
    ctx = branch_attention(proj.reshape(2, B, Spad, 3 * H), masks,
                           num_heads=num_heads)                          # [2,B,S,H]
    ctx = ctx.reshape(2, B * Spad, H)

    # ---- BertDeSelfOutput: shared dense/LN, *c* residual for BOTH branches --
    attn_out = fused_dense_residual_layernorm(
        ctx, p["attnout_w"], p["attnout_b"], x,
        p["attnout_ln_g"], p["attnout_ln_b"],
        residual_branch=0, eps=eps, row_tile=row_tile)                   # [2,N,H]

    # ---- BertDeIntermediate (erf-gelu) ---------------------------------------
    inter = fused_linear(attn_out, p["inter_w"], p["inter_b"],
                         activation="gelu", row_tile=row_tile)           # [2,N,I]

    # ---- BertDeOutput ---------------------------------------------------------
    out = fused_dense_residual_layernorm(
        inter, p["out_w"], p["out_b"], attn_out,
        p["out_ln_g"], p["out_ln_b"], eps=eps, row_tile=row_tile)        # [2,N,H]
    return out


def bert_decoder_forward(hidden_states, cattention_mask, qattention_mask,
                         prepared_layer_params, *, num_heads,
                         output_all_deencoded_layers=True,
                         row_tile=_DEFAULT_ROW_TILE):
    """Mirrors BertDecoder.forward (eval mode).  Masks are BERT-style additive
    extended masks of shape [B, 1, 1, S] (0 visible / -10000 masked)."""
    B, S, H = hidden_states.shape
    assert H % num_heads == 0
    Spad = _round_up(max(S, 8), 8)
    compute_dtype = prepared_layer_params[0]["proj_w"].dtype

    x = hidden_states.astype(compute_dtype)
    cm = cattention_mask.reshape(B, 1, S).astype(jnp.float32)
    qm = qattention_mask.reshape(B, 1, S).astype(jnp.float32)
    if Spad != S:
        # One-time sequence pad kept through all layers; padded keys are masked.
        x = jnp.pad(x, ((0, 0), (0, Spad - S), (0, 0)))
        pad = jnp.full((B, 1, Spad - S), _MASK_PAD, jnp.float32)
        cm = jnp.concatenate([cm, pad], axis=-1)
        qm = jnp.concatenate([qm, pad], axis=-1)
    masks = jnp.stack([cm, qm], axis=0)                    # [2, B, 1, Spad], once
    x = x.reshape(B * Spad, H)                             # first layer: c == q

    c_layers, q_layers = [], []

    def collect(xx):
        y = xx.reshape(2, B, Spad, H)[:, :, :S, :]
        c_layers.append(y[0])
        q_layers.append(y[1])

    for p in prepared_layer_params:
        x = bert_de_layer_forward(x, masks, p, B=B, Spad=Spad,
                                  num_heads=num_heads, row_tile=row_tile)
        if output_all_deencoded_layers:
            collect(x)
    if not output_all_deencoded_layers:
        collect(x)
    return c_layers, q_layers


# --------------------------------------------------------------------------- #
# parameters + pure-JAX reference (mirrors the PyTorch forward exactly)
# --------------------------------------------------------------------------- #
def init_layer_params(key, hidden_size, intermediate_size, dtype=jnp.float32):
    # 11 weights + 11 biases + 3 gammas + 3 betas = 28 keys needed; split 32.
    keys = iter(jax.random.split(key, 32))

    def w(i, o):
        return (0.1 * jax.random.normal(next(keys), (i, o))).astype(dtype)

    def b(o):
        return (0.05 * jax.random.normal(next(keys), (o,))).astype(dtype)

    def g(o):
        return (1.0 + 0.1 * jax.random.normal(next(keys), (o,))).astype(dtype)

    def bt(o):
        return (0.05 * jax.random.normal(next(keys), (o,))).astype(dtype)

    H, I = hidden_size, intermediate_size
    return {
        # BertMultiAttention (weights stored as [in, out] == PyTorch weight.T)
        "attn_q_w": w(H, H), "attn_q_b": b(H),
        "attn_k_w": w(H, H), "attn_k_b": b(H),
        "attn_v_w": w(H, H), "attn_v_b": b(H),
        "attn_qq_w": w(H, H), "attn_qq_b": b(H),
        "attn_qk_w": w(H, H), "attn_qk_b": b(H),
        "attn_qv_w": w(H, H), "attn_qv_b": b(H),
        # BertDeSelfOutput (module only ever uses .dense/.LayerNorm for both branches)
        "attnout_w": w(H, H), "attnout_b": b(H),
        "attnout_ln_g": g(H), "attnout_ln_b": bt(H),
        # BertDeIntermediate
        "inter_w": w(H, I), "inter_b": b(I),
        "inter_qw": w(H, I), "inter_qb": b(I),
        # BertDeOutput
        "out_w": w(I, H), "out_b": b(H),
        "out_qw": w(I, H), "out_qb": b(H),
        "out_ln_g": g(H), "out_ln_b": bt(H),
        "out_qln_g": g(H), "out_qln_b": bt(H),
    }


def _reference_decoder(hidden_states, cmask, qmask, layer_params, *, num_heads,
                       eps=_LN_EPS):
    B, S, H = hidden_states.shape
    D = H // num_heads
    hi = lax.Precision.HIGHEST

    def linear(x, w, b):
        return jnp.einsum("...i,ih->...h", x, w, precision=hi) + b

    def layer_norm(x, g, b):
        u = jnp.mean(x, axis=-1, keepdims=True)
        s = jnp.mean((x - u) ** 2, axis=-1, keepdims=True)
        return (x - u) / jnp.sqrt(s + eps) * g + b

    def gelu(x):
        return x * 0.5 * (1.0 + lax.erf(x / _SQRT2))

    def softmax(x):
        x = x - jnp.max(x, axis=-1, keepdims=True)
        e = jnp.exp(x)
        return e / jnp.sum(e, axis=-1, keepdims=True)

    def to_heads(x):
        return x.reshape(B, S, num_heads, D).transpose(0, 2, 1, 3)

    def attention(qx, kx, vx, mask):
        s = jnp.einsum("bhqd,bhkd->bhqk", qx, kx, precision=hi)
        s = s / math.sqrt(D) + mask
        p = softmax(s)
        o = jnp.einsum("bhqk,bhkd->bhqd", p, vx, precision=hi)
        return o.transpose(0, 2, 1, 3).reshape(B, S, H)

    c = hidden_states
    q = hidden_states
    c_layers, q_layers = [], []
    for p in layer_params:
        enc, dec = c, q
        ctx = attention(to_heads(linear(dec, p["attn_q_w"], p["attn_q_b"])),
                        to_heads(linear(enc, p["attn_k_w"], p["attn_k_b"])),
                        to_heads(linear(enc, p["attn_v_w"], p["attn_v_b"])), cmask)
        qctx = attention(to_heads(linear(enc, p["attn_qq_w"], p["attn_qq_b"])),
                         to_heads(linear(dec, p["attn_qk_w"], p["attn_qk_b"])),
                         to_heads(linear(dec, p["attn_qv_w"], p["attn_qv_b"])), qmask)
        catt = layer_norm(linear(ctx, p["attnout_w"], p["attnout_b"]) + c,
                          p["attnout_ln_g"], p["attnout_ln_b"])
        qatt = layer_norm(linear(qctx, p["attnout_w"], p["attnout_b"]) + c,  # quirk
                          p["attnout_ln_g"], p["attnout_ln_b"])
        ci = gelu(linear(catt, p["inter_w"], p["inter_b"]))
        qi = gelu(linear(qatt, p["inter_qw"], p["inter_qb"]))
        c = layer_norm(linear(ci, p["out_w"], p["out_b"]) + catt,
                       p["out_ln_g"], p["out_ln_b"])
        q = layer_norm(linear(qi, p["out_qw"], p["out_qb"]) + qatt,
                       p["out_qln_g"], p["out_qln_b"])
        c_layers.append(c)
        q_layers.append(q)
    return c_layers, q_layers


# --------------------------------------------------------------------------- #
if __name__ == "__main__":
    # Small-but-lane-aligned shapes (H multiple of 128 so the attention
    # BlockSpecs can select the Q/K/V chunks without extra DMA).
    B, S, H, NH, I = 2, 16, 128, 4, 512
    NUM_LAYERS = 6

    key = jax.random.PRNGKey(0)
    k_hidden, k_params = jax.random.split(key)
    hidden = jax.random.normal(k_hidden, (B, S, H), jnp.float32)

    layer_keys = jax.random.split(k_params, NUM_LAYERS)
    raw_layer_params = [init_layer_params(k, H, I) for k in layer_keys]
    # One-time weight fusion/stacking (perf feedback); use dtype=jnp.bfloat16
    # on v6e/v7x for full-rate MXU + half the weight footprint.
    prepared_params = prepare_decoder_params(raw_layer_params)

    # BERT-style additive extended masks [B, 1, 1, S] (0 visible / -10000 masked)
    cmask = jnp.where(jnp.arange(S) < S - 2, 0.0, _MASK_PAD).astype(jnp.float32)
    cmask = jnp.broadcast_to(cmask.reshape(1, 1, 1, S), (B, 1, 1, S))
    qmask = jnp.where(jnp.arange(S) < S - 1, 0.0, _MASK_PAD).astype(jnp.float32)
    qmask = jnp.broadcast_to(qmask.reshape(1, 1, 1, S), (B, 1, 1, S))

    c_layers, q_layers = bert_decoder_forward(hidden, cmask, qmask,
                                              prepared_params, num_heads=NH)
    jax.block_until_ready((c_layers, q_layers))

    c_ref, q_ref = _reference_decoder(hidden, cmask, qmask, raw_layer_params,
                                      num_heads=NH)

    assert len(c_layers) == NUM_LAYERS and len(q_layers) == NUM_LAYERS
    for i in range(NUM_LAYERS):
        assert c_layers[i].shape == (B, S, H)
        assert q_layers[i].shape == (B, S, H)
        assert jnp.allclose(c_layers[i], c_ref[i], atol=2e-3, rtol=2e-3), \
            f"c-branch mismatch at layer {i}"
        assert jnp.allclose(q_layers[i], q_ref[i], atol=2e-3, rtol=2e-3), \
            f"q-branch mismatch at layer {i}"

    print("KERNEL_OK")
</pallas_src>

<mosaic_0001>
module attributes {stable_mosaic.version = 11 : i64} {
  func.func @_linear_kernel(%arg0: i32, %arg1: i32, %arg2: memref<1x32x128xf32, #tpu.memory_space<vmem>>, %arg3: memref<1x128x384xf32, #tpu.memory_space<vmem>>, %arg4: memref<1x1x384xf32, #tpu.memory_space<vmem>>, %arg5: memref<1x32x384xf32, #tpu.memory_space<vmem>>) attributes {dimension_semantics = [#tpu.dimension_semantics<parallel>, #tpu.dimension_semantics<arbitrary>], iteration_bounds = array<i64: 2, 1>, scalar_prefetch = 0 : i64, scratch_operands = 0 : i64, tpu.core_type = #tpu.core_type<tc>, window_params = [{transform_indices = @transform_0, window_bounds = array<i64: 1, 32, 128>}, {transform_indices = @transform_1, window_bounds = array<i64: 1, 128, 384>}, {transform_indices = @transform_2, window_bounds = array<i64: 1, 1, 384>}, {transform_indices = @transform_3, window_bounds = array<i64: 1, 32, 384>}]} {
    %c0 = arith.constant 0 : index
    %c0_0 = arith.constant 0 : index
    %c0_1 = arith.constant 0 : index
    %0 = vector.load %arg2[%c0, %c0_0, %c0_1] : memref<1x32x128xf32, #tpu.memory_space<vmem>>, vector<1x32x128xf32>
    %1 = vector.shape_cast %0 : vector<1x32x128xf32> to vector<32x128xf32>
    %c0_2 = arith.constant 0 : index
    %c0_3 = arith.constant 0 : index
    %c0_4 = arith.constant 0 : index
    %2 = vector.load %arg3[%c0_2, %c0_3, %c0_4] : memref<1x128x384xf32, #tpu.memory_space<vmem>>, vector<1x128x384xf32>
    %3 = vector.shape_cast %2 : vector<1x128x384xf32> to vector<128x384xf32>
    %cst = arith.constant dense<0.000000e+00> : vector<32x384xf32>
    %4 = tpu.matmul %1, %3, %cst {dimension_numbers = #tpu.dot_dimension_numbers<[1], [0], [0], [1], [0, 0, 1, 1], [], []>} : vector<32x128xf32>, vector<128x384xf32>, vector<32x384xf32> -> vector<32x384xf32>
    %c0_5 = arith.constant 0 : index
    %c0_6 = arith.constant 0 : index
    %c0_7 = arith.constant 0 : index
    %5 = vector.load %arg4[%c0_5, %c0_6, %c0_7] : memref<1x1x384xf32, #tpu.memory_space<vmem>>, vector<1x1x384xf32>
    %6 = vector.shape_cast %5 : vector<1x1x384xf32> to vector<1x384xf32>
    %7 = vector.broadcast %6 : vector<1x384xf32> to vector<32x384xf32>
    %8 = arith.addf %4, %7 : vector<32x384xf32>
    %c0_8 = arith.constant 0 : index
    %c0_9 = arith.constant 0 : index
    %c0_10 = arith.constant 0 : index
    %9 = vector.load %arg5[%c0_8, %c0_9, %c0_10] : memref<1x32x384xf32, #tpu.memory_space<vmem>>, vector<1x32x384xf32>
    %10 = vector.shape_cast %9 : vector<1x32x384xf32> to vector<32x384xf32>
    %11 = vector.shape_cast %8 : vector<32x384xf32> to vector<1x32x384xf32>
    tpu.vector_store %arg5[%c0_8, %c0_9, %c0_10], %11 {strides = array<i32>} : memref<1x32x384xf32, #tpu.memory_space<vmem>>, vector<1x32x384xf32>,
    return
  }
  func.func @transform_0(%arg0: i32, %arg1: i32) -> (i32, i32, i32) {
    %c0_i32 = arith.constant 0 : i32
    %c0_i32_0 = arith.constant 0 : i32
    %c0_i32_1 = arith.constant 0 : i32
    return %c0_i32, %arg1, %c0_i32_0 : i32, i32, i32
  }
  func.func @transform_1(%arg0: i32, %arg1: i32) -> (i32, i32, i32) {
    %c0_i32 = arith.constant 0 : i32
    %c0_i32_0 = arith.constant 0 : i32
    %c0_i32_1 = arith.constant 0 : i32
    return %arg0, %c0_i32, %c0_i32_0 : i32, i32, i32
  }
  func.func @transform_2(%arg0: i32, %arg1: i32) -> (i32, i32, i32) {
    %c0_i32 = arith.constant 0 : i32
    %c0_i32_0 = arith.constant 0 : i32
    %c0_i32_1 = arith.constant 0 : i32
    return %arg0, %c0_i32, %c0_i32_0 : i32, i32, i32
  }
  func.func @transform_3(%arg0: i32, %arg1: i32) -> (i32, i32, i32) {
    %c0_i32 = arith.constant 0 : i32
    %c0_i32_0 = arith.constant 0 : i32
    return %arg0, %arg1, %c0_i32 : i32, i32, i32
  }
}

</mosaic_0001>

<llo_original>
// kernel: tpu_custom_call.1
$region0: #{tpu_custom_call.1}
  #allocation0 [shape = 'u32[]', space=smem, size = 0x4, offset = 0x4, fixed_abs, tag = 'smem constant byte address 0x4 - core index']
  #allocation1 [shape = 'u32[144,128]{1,0:T(1,128)}', space=vmem, size = 0x12000, scoped, tag = 'internal scratch']
  %s0 = inlined_call_operand.hbm [shape: f32[1,32,128], index: 0, kind: input, shape index: {}]
  %s1 = inlined_call_operand.hbm [shape: f32[2,128,384], index: 1, kind: input, shape index: {}]
  %s2 = inlined_call_operand.vmem [shape: f32[2,1,384], index: 2, kind: input, shape index: {}]
  %s3 = inlined_call_operand.hbm [shape: f32[2,32,384], index: 3, kind: output, shape index: {}]
  %s4 = sld [smem:[#allocation0]]
  $region53: #{tpu_custom_call.1} parent=0
    _
  %s6 = ssub.s32 1, %s4
  %s7 = scalar_select 0, %s6, %s4
  $region1: #{tpu_custom_call.1} parent=0
    #allocation2 [shape = 'u8[16384]{0}', space=vmem, size = 0x4000, scoped, tag = 'input window, operand 0, single buffered']
    #allocation3 [shape = 's32[2]{0}', space=sflag, size = 0x8, scoped, tag = 'scoped memory for tpu_custom_call.1']
    #allocation4 [shape = 's32[2]{0}', space=sflag, size = 0x8, scoped, tag = 'scoped memory for tpu_custom_call.1']
    #allocation5 [shape = 'u8[393216]{0}', space=vmem, size = 0x60000, scoped, tag = 'input window, operand 1']
    #allocation6 [shape = 's32[2]{0}', space=sflag, size = 0x8, scoped, tag = 'scoped memory for tpu_custom_call.1']
    #allocation7 [shape = 'u8[98304]{0}', space=vmem, size = 0x18000, scoped, tag = 'output window, operand 0']
    %8 = vsyncpa [#allocation3], 0
    %9 = vsyncpa [#allocation6], 0
    %s10 = scalar_lea.sflag [#allocation6], 1
    %11 = vsyncpa %s10, 0
    %12 = vsyncpa [#allocation4], 0
    %s13 = scalar_lea.sflag [#allocation4], 1
    %14 = vsyncpa %s13, 0
    loop: start=0, step=1, limit=4
    $region2: #{tpu_custom_call.1} parent=1 // loop_pre_header
      _
    $region3: #{tpu_custom_call.1} parent=1 // loop_header
      %s16 = sphi 0, %s20
      %p17 = scmp.ge.s32.totalorder %s16, 4
      %s23 = sphi 0, %s35
      %s24 = sphi 0, %s31
      %s25 = sphi 0, %s23
      %s26 = sphi 0, %s24
      %s27 = sphi 0, %s25
      %s28 = sphi 0, %s26
      %s38 = sphi 0, %s40
      %s41 = sphi 0, %s38
      %s42 = sphi 0, %s41
      %s58 = sphi 0, %s42
      %s64 = sphi 0, %s66
      %s67 = sphi 0, %s64
      %s68 = sphi 0, %s67
      %s84 = sphi 0, %s68
      %s90 = sphi 0, %s92
      %s93 = sphi 0, %s90
      %s94 = sphi 0, %s93
      %s110 = sphi 0, %s94
      %s118 = sphi 0, %s120
      %s121 = sphi 0, %s118
      %s122 = sphi 0, %s121
      %s138 = sphi 0, %s122
    $region4: #{tpu_custom_call.1} parent=1 // loop_header_branch
      %19 = sbr.rel (%p17) target = $region8
    $region5: #{tpu_custom_call.1} parent=1 // loop_body
      %s21 = ssub.s32 %s16, 1
      %s22 = ssub.s32 %s16, 2
      %s29 = sadd.s32 1, %s24
      %p30 = scmp.ge.s32.totalorder %s29, 1
      %s31 = scalar_select %p30, 0, %s29
      %s32 = sadd.s32 1, %s23
      %s33 = scalar_select %p30, %s32, %s23
      %p34 = scmp.ge.s32.totalorder %s33, 2
      %s35 = scalar_select %p34, 0, %s33
      %s36 = ssub.s32 %s24, %s31
      %p37 = scmp.eq.s32.totalorder %s36, 0
      %s39 = sadd.s32 %s38, 1
      %s40 = scalar_select %p37, %s38, %s39
      %p43 = pneg %p37
      %p44 = scmp.eq.s32.totalorder %s16, 1
      %p45 = por %p43, %p44
      %p46 = scmp.ne.s32.totalorder %s38, %s41
      %p47 = scmp.eq.s32.totalorder %s16, 0
      %p48 = por %p46, %p47
      %p49 = scmp.ne.s32.totalorder %s38, %s41
      %p50 = scmp.eq.s32.totalorder %s21, 1
      %p51 = por %p49, %p50
      %p52 = scmp.ne.s32.totalorder %s41, %s42
      %p53 = scmp.eq.s32.totalorder %s21, 0
      %p54 = por %p52, %p53
      %p55 = scmp.ne.s32.totalorder %s41, %s42
      %p56 = scmp.eq.s32.totalorder %s22, 1
      %p57 = por %p55, %p56
      %p59 = scmp.ne.s32.totalorder %s42, %s58
      %p60 = scmp.eq.s32.totalorder %s22, 0
      %p61 = por %p59, %p60
      %s62 = ssub.s32 %s23, %s35
      %p63 = scmp.eq.s32.totalorder %s62, 0
      %s65 = sadd.s32 %s64, 1
      %s66 = scalar_select %p63, %s64, %s65
      %p69 = pneg %p63
      %p70 = scmp.eq.s32.totalorder %s16, 1
      %p71 = por %p69, %p70
      %p72 = scmp.ne.s32.totalorder %s64, %s67
      %p73 = scmp.eq.s32.totalorder %s16, 0
      %p74 = por %p72, %p73
      %p75 = scmp.ne.s32.totalorder %s64, %s67
      %p76 = scmp.eq.s32.totalorder %s21, 1
      %p77 = por %p75, %p76
      %p78 = scmp.ne.s32.totalorder %s67, %s68
      %p79 = scmp.eq.s32.totalorder %s21, 0
      %p80 = por %p78, %p79
      %p81 = scmp.ne.s32.totalorder %s67, %s68
      %p82 = scmp.eq.s32.totalorder %s22, 1
      %p83 = por %p81, %p82
      %p85 = scmp.ne.s32.totalorder %s68, %s84
      %p86 = scmp.eq.s32.totalorder %s22, 0
      %p87 = por %p85, %p86
      %s88 = ssub.s32 %s23, %s35
      %p89 = scmp.eq.s32.totalorder %s88, 0
      %s91 = sadd.s32 %s90, 1
      %s92 = scalar_select %p89, %s90, %s91
      %p95 = pneg %p89
      %p96 = scmp.eq.s32.totalorder %s16, 1
      %p97 = por %p95, %p96
      %p98 = scmp.ne.s32.totalorder %s90, %s93
      %p99 = scmp.eq.s32.totalorder %s16, 0
      %p100 = por %p98, %p99
      %p101 = scmp.ne.s32.totalorder %s90, %s93
      %p102 = scmp.eq.s32.totalorder %s21, 1
      %p103 = por %p101, %p102
      %p104 = scmp.ne.s32.totalorder %s93, %s94
      %p105 = scmp.eq.s32.totalorder %s21, 0
      %p106 = por %p104, %p105
      %p107 = scmp.ne.s32.totalorder %s93, %s94
      %p108 = scmp.eq.s32.totalorder %s22, 1
      %p109 = por %p107, %p108
      %p111 = scmp.ne.s32.totalorder %s94, %s110
      %p112 = scmp.eq.s32.totalorder %s22, 0
      %p113 = por %p111, %p112
      %s114 = ssub.s32 %s23, %s35
      %s115 = ssub.s32 %s24, %s31
      %s116 = sor.u32 %s114, %s115
      %p117 = scmp.eq.s32.totalorder %s116, 0
      %s119 = sadd.s32 %s118, 1
      %s120 = scalar_select %p117, %s118, %s119
      %p123 = pneg %p117
      %p124 = scmp.eq.s32.totalorder %s16, 1
      %p125 = por %p123, %p124
      %p126 = scmp.ne.s32.totalorder %s118, %s121
      %p127 = scmp.eq.s32.totalorder %s16, 0
      %p128 = por %p126, %p127
      %p129 = scmp.ne.s32.totalorder %s118, %s121
      %p130 = scmp.eq.s32.totalorder %s21, 1
      %p131 = por %p129, %p130
      %p132 = scmp.ne.s32.totalorder %s121, %s122
      %p133 = scmp.eq.s32.totalorder %s21, 0
      %p134 = por %p132, %p133
      %p135 = scmp.ne.s32.totalorder %s121, %s122
      %p136 = scmp.eq.s32.totalorder %s22, 1
      %p137 = por %p135, %p136
      %p139 = scmp.ne.s32.totalorder %s122, %s138
      %p140 = scmp.eq.s32.totalorder %s22, 0
      %p141 = por %p139, %p140
      %p142 = scmp.le.s32.totalorder 1, %s16
      %p143 = scmp.lt.s32.totalorder %s16, 3
      %p144 = pnand %p142, %p143
      %p145 = pneg %p144
      // Predicated region
      $region9: #{tpu_custom_call.1} parent=5 // pred_check
        _
      $region10: #{tpu_custom_call.1} parent=5 // pred_check_branch
        %147 = sbr.rel (%p144) target = $region12
      $region11: #{tpu_custom_call.1} parent=5 // pred_region
        %s148 = ssub.s32 %s16, 1
        // Predicated region
        $region13: #{tpu_custom_call.1} parent=11 // pred_check
          %p149 = pneg %p54
        $region14: #{tpu_custom_call.1} parent=11 // pred_check_branch
          %151 = sbr.rel (%p149) target = $region16
        $region15: #{tpu_custom_call.1} parent=11 // pred_region
          %s152 = smul.u32 4, %s26
          %s154 = ssub.s32 512, 512
          %155 = vsyncadd [#allocation3], %s154
          %s156 = smul.addr %s152, 128
          %s157 = scalar_lea.hbm %s0, %s156
          %s158 = sshll.u32 [#allocation2], 4
          %s159 = int_to_ptr.vmem [resolvable:$true] %s158
          %164 = dma.hbm_to_vmem [thread:$0]  %s157, 512, %s159, [#allocation3], 128, 128, 8
        $region16: #{tpu_custom_call.1} parent=11 // pred_fallthru
          _
      $region12: #{tpu_custom_call.1} parent=5 // pred_fallthru
        _
      %p165 = scmp.lt.s32.totalorder %s16, 2
      // Predicated region
      $region17: #{tpu_custom_call.1} parent=5 // pred_check
        %p166 = pneg %p165
      $region18: #{tpu_custom_call.1} parent=5 // pred_check_branch
        %168 = sbr.rel (%p166) target = $region20
      $region19: #{tpu_custom_call.1} parent=5 // pred_region
        // Predicated region
        $region21: #{tpu_custom_call.1} parent=19 // pred_check
          %p169 = pneg %p74
        $region22: #{tpu_custom_call.1} parent=19 // pred_check_branch
          %171 = sbr.rel (%p169) target = $region24
        $region23: #{tpu_custom_call.1} parent=19 // pred_region
          %s172 = sand.u32 %s64, 1
          %s173 = scalar_lea.sflag [#allocation6], %s172
          %s174 = sand.u32 %s64, 1
          %s175 = smul.addr %s174, 384
          %s176 = scalar_lea.vmem [#allocation5], %s175
          %s178 = ssub.s32 6144, 6144
          %179 = vsyncadd %s173, %s178
          %s180 = smul.addr %s23, 48
          %s181 = smul.addr %s180, 128
          %s182 = scalar_lea.hbm %s1, %s181
          %s183 = sshll.u32 %s176, 4
          %s184 = int_to_ptr.vmem [resolvable:$true] %s183
          %189 = dma.hbm_to_vmem [thread:$0]  %s182, 6144, %s184, %s173, 384, 384, 24
        $region24: #{tpu_custom_call.1} parent=19 // pred_fallthru
          _
        // Predicated region
        $region25: #{tpu_custom_call.1} parent=19 // pred_check
          %p190 = pneg %p100
        $region26: #{tpu_custom_call.1} parent=19 // pred_check_branch
          %192 = sbr.rel (%p190) target = $region28
        $region27: #{tpu_custom_call.1} parent=19 // pred_region
          %p193 = scmp.lt.s32.totalorder %s23, 1
          %s194 = scalar_select %p193, %s23, 1
          %s195 = smul.addr %s194, 3
          %s196 = scalar_lea.vmem %s2, %s195
        $region28: #{tpu_custom_call.1} parent=19 // pred_fallthru
          _
      $region20: #{tpu_custom_call.1} parent=5 // pred_fallthru
        _
      %p197 = scmp.le.s32.totalorder 1, %s16
      %p198 = scmp.lt.s32.totalorder %s16, 3
      %p199 = pnand %p197, %p198
      %p200 = pneg %p199
      // Predicated region
      $region29: #{tpu_custom_call.1} parent=5 // pred_check
        _
      $region30: #{tpu_custom_call.1} parent=5 // pred_check_branch
        %202 = sbr.rel (%p199) target = $region32
      $region31: #{tpu_custom_call.1} parent=5 // pred_region
        %s203 = ssub.s32 %s16, 1
        // Predicated region
        $region33: #{tpu_custom_call.1} parent=31 // pred_check
          %p204 = pneg %p54
        $region34: #{tpu_custom_call.1} parent=31 // pred_check_branch
          %206 = sbr.rel (%p204) target = $region36
        $region35: #{tpu_custom_call.1} parent=31 // pred_region
          %207 = dma.done [#allocation3], 512
        $region36: #{tpu_custom_call.1} parent=31 // pred_fallthru
          _
        %s208 = sand.u32 %s67, 1
        %s209 = scalar_lea.sflag [#allocation6], %s208
        %s210 = sand.u32 %s67, 1
        %s211 = smul.addr %s210, 384
        %s212 = scalar_lea.vmem [#allocation5], %s211
        // Predicated region
        $region37: #{tpu_custom_call.1} parent=31 // pred_check
          %p213 = pneg %p80
        $region38: #{tpu_custom_call.1} parent=31 // pred_check_branch
          %215 = sbr.rel (%p213) target = $region40
        $region39: #{tpu_custom_call.1} parent=31 // pred_region
          %216 = dma.done %s209, 6144
        $region40: #{tpu_custom_call.1} parent=31 // pred_fallthru
          _
        %p217 = pneg %p54
        %p218 = pneg %p51
        %s219 = sand.u32 %s67, 1
        %s220 = scalar_lea.sflag [#allocation6], %s219
        %s221 = sand.u32 %s67, 1
        %s222 = smul.addr %s221, 384
        %s223 = scalar_lea.vmem [#allocation5], %s222
        %p224 = pneg %p80
        %p225 = pneg %p77
        %p226 = scmp.lt.s32.totalorder %s25, 1
        %s227 = scalar_select %p226, %s25, 1
        %s228 = smul.addr %s227, 3
        %s229 = scalar_lea.vmem %s2, %s228
        %p230 = pneg %p106
        %p231 = pneg %p103
        %p232 = pneg %p134
        %p233 = pneg %p131
        %s234 = sand.u32 %s121, 1
        %s235 = scalar_lea.sflag [#allocation4], %s234
        %s236 = sand.u32 %s121, 1
        %s237 = smul.addr %s236, 96
        %s238 = scalar_lea.vmem [#allocation7], %s237
        %s239 = smul.u32 4, %s26
        %p240 = scmp.lt.s32.totalorder %s25, 1
        %s241 = scalar_select %p240, %s25, 1
        %s242 = smul.addr %s241, 3
        %s243 = scalar_lea.vmem %s2, %s242
        %s244 = smul.u32 4, %s26
        %v245 = vld [vmem:[#allocation2] sm:$0xff]
        %v246 = vld [vmem:[#allocation2 + $0x8] sm:$0xff]
        %v247 = vld [vmem:[#allocation2 + $0x10] sm:$0xff]
        %v248 = vld [vmem:[#allocation2 + $0x18] sm:$0xff]
        %v249 = vld [vmem:[%s212] sm:$0xff]
        %v250 = vld [vmem:[%s212 + $0x8] sm:$0xff]
        %v251 = vld [vmem:[%s212 + $0x10] sm:$0xff]
        %v252 = vld [vmem:[%s212 + $0x18] sm:$0xff]
        %v253 = vld [vmem:[%s212 + $0x20] sm:$0xff]
        %v254 = vld [vmem:[%s212 + $0x28] sm:$0xff]
        %v255 = vld [vmem:[%s212 + $0x30] sm:$0xff]
        %v256 = vld [vmem:[%s212 + $0x38] sm:$0xff]
        %v257 = vld [vmem:[%s212 + $0x40] sm:$0xff]
        %v258 = vld [vmem:[%s212 + $0x48] sm:$0xff]
        %v259 = vld [vmem:[%s212 + $0x50] sm:$0xff]
        %v260 = vld [vmem:[%s212 + $0x58] sm:$0xff]
        %v261 = vld [vmem:[%s212 + $0x60] sm:$0xff]
        %v262 = vld [vmem:[%s212 + $0x68] sm:$0xff]
        %v263 = vld [vmem:[%s212 + $0x70] sm:$0xff]
        %v264 = vld [vmem:[%s212 + $0x78] sm:$0xff]
        %v265 = vld [vmem:[%s212 + $0x80] sm:$0xff]
        %v266 = vld [vmem:[%s212 + $0x88] sm:$0xff]
        %v267 = vld [vmem:[%s212 + $0x90] sm:$0xff]
        %v268 = vld [vmem:[%s212 + $0x98] sm:$0xff]
        %v269 = vld [vmem:[%s212 + $0xa0] sm:$0xff]
        %v270 = vld [vmem:[%s212 + $0xa8] sm:$0xff]
        %v271 = vld [vmem:[%s212 + $0xb0] sm:$0xff]
        %v272 = vld [vmem:[%s212 + $0xb8] sm:$0xff]
        %v273 = vld [vmem:[%s212 + $0xc0] sm:$0xff]
        %v274 = vld [vmem:[%s212 + $0xc8] sm:$0xff]
        %v275 = vld [vmem:[%s212 + $0xd0] sm:$0xff]
        %v276 = vld [vmem:[%s212 + $0xd8] sm:$0xff]
        %v277 = vld [vmem:[%s212 + $0xe0] sm:$0xff]
        %v278 = vld [vmem:[%s212 + $0xe8] sm:$0xff]
        %v279 = vld [vmem:[%s212 + $0xf0] sm:$0xff]
        %v280 = vld [vmem:[%s212 + $0xf8] sm:$0xff]
        %v281 = vld [vmem:[%s212 + $0x100] sm:$0xff]
        %v282 = vld [vmem:[%s212 + $0x108] sm:$0xff]
        %v283 = vld [vmem:[%s212 + $0x110] sm:$0xff]
        %v284 = vld [vmem:[%s212 + $0x118] sm:$0xff]
        %v285 = vld [vmem:[%s212 + $0x120] sm:$0xff]
        %v286 = vld [vmem:[%s212 + $0x128] sm:$0xff]
        %v287 = vld [vmem:[%s212 + $0x130] sm:$0xff]
        %v288 = vld [vmem:[%s212 + $0x138] sm:$0xff]
        %v289 = vld [vmem:[%s212 + $0x140] sm:$0xff]
        %v290 = vld [vmem:[%s212 + $0x148] sm:$0xff]
        %v291 = vld [vmem:[%s212 + $0x150] sm:$0xff]
        %v292 = vld [vmem:[%s212 + $0x158] sm:$0xff]
        %v293 = vld [vmem:[%s212 + $0x160] sm:$0xff]
        %v294 = vld [vmem:[%s212 + $0x168] sm:$0xff]
        %v295 = vld [vmem:[%s212 + $0x170] sm:$0xff]
        %v296 = vld [vmem:[%s212 + $0x178] sm:$0xff]
        %v297 = vld [vmem:[%s243] sm:$0x7]
        %v299 = vlaneseq
        %v300 = vshrl.u32 %v299, 7
        %v301 = vsub.s32 0, %v300
        %v302 = vrot.slane %v297, %v301
        %v303 = vlaneseq
        %v304 = vshrl.u32 %v303, 7
        %v305 = vsub.s32 1, %v304
        %v306 = vrot.slane %v297, %v305
        %v307 = vlaneseq
        %v308 = vshrl.u32 %v307, 7
        %v309 = vsub.s32 2, %v308
        %v310 = vrot.slane %v297, %v309
        %314 = vmatprep.subr.mxu0 %v250
        %315 = vmatpush1.msra.mxu0 %v249
        %316 = vmatprep.subr.mxu0 %v253
        %317 = vmatpush1.msra.mxu0 %v252
        %318 = vmatprep.subr.mxu0 %v256
        %319 = vmatpush1.msra.mxu0 %v255
        %320 = vmatprep.subr.mxu0 %v259
        %321 = vmatpush1.msra.mxu0 %v258
        %322 = vmatprep.subr.mxu0 %v262
        %323 = vmatpush1.msra.mxu0 %v261
        %324 = vmatprep.subr.mxu0 %v265
        %325 = vmatpush1.msra.mxu0 %v264
        %326 = vmatprep.subr.mxu0 %v268
        %327 = vmatpush1.msra.mxu0 %v267
        %328 = vmatprep.subr.mxu0 %v271
        %329 = vmatpush1.msra.mxu0 %v270
        %330 = vmatprep.subr.mxu0 %v274
        %331 = vmatpush1.msra.mxu0 %v273
        %332 = vmatprep.subr.mxu0 %v277
        %333 = vmatpush1.msra.mxu0 %v276
        %334 = vmatprep.subr.mxu0 %v280
        %335 = vmatpush1.msra.mxu0 %v279
        %336 = vmatprep.subr.mxu0 %v283
        %337 = vmatpush1.msra.mxu0 %v282
        %338 = vmatprep.subr.mxu0 %v286
        %339 = vmatpush1.msra.mxu0 %v285
        %340 = vmatprep.subr.mxu0 %v289
        %341 = vmatpush1.msra.mxu0 %v288
        %342 = vmatprep.subr.mxu0 %v292
        %343 = vmatpush1.msra.mxu0 %v291
        %344 = vmatprep.subr.mxu0 %v295
        %345 = vmatpush1.msra.mxu0 %v294
        %346 = vmatprep.subr.mxu0 0.0
        %347 = vmatpush1.msra.mxu0 0.0
        %348 = vmatprep.subr.mxu0 0.0
        %349 = vmatpush1.msra.mxu0 0.0
        %350 = vmatprep.subr.mxu0 0.0
        %351 = vmatpush1.msra.mxu0 0.0
        %352 = vmatprep.subr.mxu0 0.0
        %353 = vmatpush1.msra.mxu0 0.0
        %354 = vmatprep.subr.mxu0 0.0
        %355 = vmatpush1.msra.mxu0 0.0
        %356 = vmatprep.subr.mxu0 0.0
        %357 = vmatpush1.msra.mxu0 0.0
        %358 = vmatprep.subr.mxu0 0.0
        %359 = vmatpush1.msra.mxu0 0.0
        %360 = vmatprep.subr.mxu0 0.0
        %361 = vmatpush1.msra.mxu0 0.0
        %362 = vmatprep.subr.mxu0 0.0
        %363 = vmatpush1.msra.mxu0 0.0
        %364 = vmatprep.subr.mxu0 0.0
        %365 = vmatpush1.msra.mxu0 0.0
        %366 = vmatprep.subr.mxu0 0.0
        %367 = vmatpush1.msra.mxu0 0.0
        %368 = vmatprep.subr.mxu0 0.0
        %369 = vmatpush1.msra.mxu0 0.0
        %370 = vmatprep.subr.mxu0 0.0
        %371 = vmatpush1.msra.mxu0 0.0
        %372 = vmatprep.subr.mxu0 0.0
        %373 = vmatpush1.msra.mxu0 0.0
        %374 = vmatprep.subr.mxu0 0.0
        %375 = vmatpush1.msra.mxu0 0.0
        %376 = vmatprep.subr.mxu0 0.0
        %377 = vmatpush1.msra.mxu0 0.0
        %378 = vmatprep.mubr.f32.mxu0 0.0
        %379 = vmatmul.mubr.f32.gmra.mrb[0].mxu0 %v245
        %v380 = vpop.f32.mrb[0].mxu0
        %v381 = vadd.f32 %v302, %v380
        %v382 = vpop.f32.mrb[0].mxu0
        %v383 = vadd.f32 %v306, %v382
        %384 = vmatprep.mubr.f32.mxu0 0.0
        %385 = vmatmul.mubr.f32.gmra.mrb[0].mxu0 %v246
        %v386 = vpop.f32.mrb[0].mxu0
        %v387 = vadd.f32 %v302, %v386
        %v388 = vpop.f32.mrb[0].mxu0
        %v389 = vadd.f32 %v306, %v388
        %390 = vmatprep.mubr.f32.mxu0 0.0
        %391 = vmatmul.mubr.f32.gmra.mrb[0].mxu0 %v247
        %v392 = vpop.f32.mrb[0].mxu0
        %v393 = vadd.f32 %v302, %v392
        %v394 = vpop.f32.mrb[0].mxu0
        %v395 = vadd.f32 %v306, %v394
        %396 = vmatprep.mubr.f32.mxu0 0.0
        %397 = vmatmul.mubr.f32.gmra.mrb[0].mxu0 %v248
        %v398 = vpop.f32.mrb[0].mxu0
        %v399 = vadd.f32 %v302, %v398
        %v400 = vpop.f32.mrb[0].mxu0
        %v401 = vadd.f32 %v306, %v400
        %402 = vdwg.mxu0
        %403 = vmatprep.subr.mxu0 0.0
        %404 = vmatpush1.msra.mxu0 %v251
        %405 = vmatprep.subr.mxu0 0.0
        %406 = vmatpush1.msra.mxu0 %v254
        %407 = vmatprep.subr.mxu0 0.0
        %408 = vmatpush1.msra.mxu0 %v257
        %409 = vmatprep.subr.mxu0 0.0
        %410 = vmatpush1.msra.mxu0 %v260
        %411 = vmatprep.subr.mxu0 0.0
        %412 = vmatpush1.msra.mxu0 %v263
        %413 = vmatprep.subr.mxu0 0.0
        %414 = vmatpush1.msra.mxu0 %v266
        %415 = vmatprep.subr.mxu0 0.0
        %416 = vmatpush1.msra.mxu0 %v269
        %417 = vmatprep.subr.mxu0 0.0
        %418 = vmatpush1.msra.mxu0 %v272
        %419 = vmatprep.subr.mxu0 0.0
        %420 = vmatpush1.msra.mxu0 %v275
        %421 = vmatprep.subr.mxu0 0.0
        %422 = vmatpush1.msra.mxu0 %v278
        %423 = vmatprep.subr.mxu0 0.0
        %424 = vmatpush1.msra.mxu0 %v281
        %425 = vmatprep.subr.mxu0 0.0
        %426 = vmatpush1.msra.mxu0 %v284
        %427 = vmatprep.subr.mxu0 0.0
        %428 = vmatpush1.msra.mxu0 %v287
        %429 = vmatprep.subr.mxu0 0.0
        %430 = vmatpush1.msra.mxu0 %v290
        %431 = vmatprep.subr.mxu0 0.0
        %432 = vmatpush1.msra.mxu0 %v293
        %433 = vmatprep.subr.mxu0 0.0
        %434 = vmatpush1.msra.mxu0 %v296
        %435 = vmatprep.subr.mxu0 0.0
        %436 = vmatpush1.msra.mxu0 0.0
        %437 = vmatprep.subr.mxu0 0.0
        %438 = vmatpush1.msra.mxu0 0.0
        %439 = vmatprep.subr.mxu0 0.0
        %440 = vmatpush1.msra.mxu0 0.0
        %441 = vmatprep.subr.mxu0 0.0
        %442 = vmatpush1.msra.mxu0 0.0
        %443 = vmatprep.subr.mxu0 0.0
        %444 = vmatpush1.msra.mxu0 0.0
        %445 = vmatprep.subr.mxu0 0.0
        %446 = vmatpush1.msra.mxu0 0.0
        %447 = vmatprep.subr.mxu0 0.0
        %448 = vmatpush1.msra.mxu0 0.0
        %449 = vmatprep.subr.mxu0 0.0
        %450 = vmatpush1.msra.mxu0 0.0
        %451 = vmatprep.subr.mxu0 0.0
        %452 = vmatpush1.msra.mxu0 0.0
        %453 = vmatprep.subr.mxu0 0.0
        %454 = vmatpush1.msra.mxu0 0.0
        %455 = vmatprep.subr.mxu0 0.0
        %456 = vmatpush1.msra.mxu0 0.0
        %457 = vmatprep.subr.mxu0 0.0
        %458 = vmatpush1.msra.mxu0 0.0
        %459 = vmatprep.subr.mxu0 0.0
        %460 = vmatpush1.msra.mxu0 0.0
        %461 = vmatprep.subr.mxu0 0.0
        %462 = vmatpush1.msra.mxu0 0.0
        %463 = vmatprep.subr.mxu0 0.0
        %464 = vmatpush1.msra.mxu0 0.0
        %465 = vmatprep.subr.mxu0 0.0
        %466 = vmatpush1.msra.mxu0 0.0
        %467 = vmatprep.mubr.f32.mxu0 0.0
        %468 = vmatmul.mubr.f32.gmra.mrb[0].mxu0 %v245
        %v469 = vpop.f32.mrb[0].mxu0
        %v470 = vadd.f32 %v310, %v469
        %v471 = vpop.f32.mrb[0].mxu0
        %472 = vmatprep.mubr.f32.mxu0 0.0
        %473 = vmatmul.mubr.f32.gmra.mrb[0].mxu0 %v246
        %v474 = vpop.f32.mrb[0].mxu0
        %v475 = vadd.f32 %v310, %v474
        %v476 = vpop.f32.mrb[0].mxu0
        %477 = vmatprep.mubr.f32.mxu0 0.0
        %478 = vmatmul.mubr.f32.gmra.mrb[0].mxu0 %v247
        %v479 = vpop.f32.mrb[0].mxu0
        %v480 = vadd.f32 %v310, %v479
        %v481 = vpop.f32.mrb[0].mxu0
        %482 = vmatprep.mubr.f32.mxu0 0.0
        %483 = vmatmul.mubr.f32.gmra.mrb[0].mxu0 %v248
        %v484 = vpop.f32.mrb[0].mxu0
        %v485 = vadd.f32 %v310, %v484
        %v486 = vpop.f32.mrb[0].mxu0
        %487 = vdwg.mxu0
        %488 = vst [vmem:[%s238] sm:$0xff] %v381
        %489 = vst [vmem:[%s238 + $0x8] sm:$0xff] %v383
        %490 = vst [vmem:[%s238 + $0x10] sm:$0xff] %v470
        %491 = vst [vmem:[%s238 + $0x18] sm:$0xff] %v387
        %492 = vst [vmem:[%s238 + $0x20] sm:$0xff] %v389
        %493 = vst [vmem:[%s238 + $0x28] sm:$0xff] %v475
        %494 = vst [vmem:[%s238 + $0x30] sm:$0xff] %v393
        %495 = vst [vmem:[%s238 + $0x38] sm:$0xff] %v395
        %496 = vst [vmem:[%s238 + $0x40] sm:$0xff] %v480
        %497 = vst [vmem:[%s238 + $0x48] sm:$0xff] %v399
        %498 = vst [vmem:[%s238 + $0x50] sm:$0xff] %v401
        %499 = vst [vmem:[%s238 + $0x58] sm:$0xff] %v485
        %s500 = sand.u32 %s121, 1
        %s501 = scalar_lea.sflag [#allocation4], %s500
        %s502 = sand.u32 %s121, 1
        %s503 = smul.addr %s502, 96
        %s504 = scalar_lea.vmem [#allocation7], %s503
        // Predicated region
        $region41: #{tpu_custom_call.1} parent=31 // pred_check
          %p505 = pneg %p131
        $region42: #{tpu_custom_call.1} parent=31 // pred_check_branch
          %507 = sbr.rel (%p505) target = $region44
        $region43: #{tpu_custom_call.1} parent=31 // pred_region
          %s508 = smul.u32 4, %s26
          %s510 = ssub.s32 1536, 1536
          %511 = vsyncadd %s501, %s510
          %s512 = smul.addr %s508, 3
          %s513 = smul.addr %s25, 12
          %s514 = sadd.s32 %s512, %s513
          %s515 = smul.addr %s514, 128
          %s516 = scalar_lea.hbm %s3, %s515
          %s517 = sshll.u32 %s504, 4
          %s518 = int_to_ptr.vmem [resolvable:$true] %s517
          %523 = dma.vmem_to_hbm [thread:$0]  %s518, 1536, %s516, %s501, 384, 384, 24
        $region44: #{tpu_custom_call.1} parent=31 // pred_fallthru
          _
      $region32: #{tpu_custom_call.1} parent=5 // pred_fallthru
        _
      %p524 = scmp.le.s32.totalorder 2, %s16
      // Predicated region
      $region45: #{tpu_custom_call.1} parent=5 // pred_check
        %p525 = pneg %p524
      $region46: #{tpu_custom_call.1} parent=5 // pred_check_branch
        %527 = sbr.rel (%p525) target = $region48
      $region47: #{tpu_custom_call.1} parent=5 // pred_region
        %s528 = ssub.s32 %s16, 2
        // Predicated region
        $region49: #{tpu_custom_call.1} parent=47 // pred_check
          %p529 = pneg %p137
        $region50: #{tpu_custom_call.1} parent=47 // pred_check_branch
          %531 = sbr.rel (%p529) target = $region52
        $region51: #{tpu_custom_call.1} parent=47 // pred_region
          %s532 = sand.u32 %s122, 1
          %s533 = scalar_lea.sflag [#allocation4], %s532
          %s534 = sand.u32 %s122, 1
          %s535 = smul.addr %s534, 96
          %s536 = scalar_lea.vmem [#allocation7], %s535
          %537 = dma.done %s533, 1536
        $region52: #{tpu_custom_call.1} parent=47 // pred_fallthru
          _
      $region48: #{tpu_custom_call.1} parent=5 // pred_fallthru
        _
    $region6: #{tpu_custom_call.1} parent=1 // loop_footer
      %s20 = sadd.s32 1, %s16
    $region7: #{tpu_custom_call.1} parent=1 // loop_footer_branch
      %15 = sbr.rel target = $region3
    $region8: #{tpu_custom_call.1} parent=1 // loop_exit
      _
    %538 = vsyncpa [#allocation3], 1
    %s539 = scalar_lea.sflag [#allocation3], 1
    %540 = vsyncpa %s539, 1
    %541 = vsyncpa [#allocation6], 1
    %s542 = scalar_lea.sflag [#allocation6], 1
    %543 = vsyncpa %s542, 1
    %544 = vsyncpa [#allocation4], 1
    %s545 = scalar_lea.sflag [#allocation4], 1
    %546 = vsyncpa %s545, 1

</llo_original>
